<compile_context>
chip_gen: v5e
topology: v5e:2x2
jax: 0.10.0
libtpu: 0.0.40
codegen_flags: <defaults>
</compile_context>

<pallas_src>
import functools

import jax
import jax.numpy as jnp
from jax.experimental import pallas as pl
from jax.experimental.pallas import tpu as pltpu

_LANE = 128
_MIB = 2 ** 20


def _round_up(x: int, m: int) -> int:
    return ((x + m - 1) // m) * m


def _vmem_capacity_bytes() -> int:
    """Generation-aware VMEM budget (128 MiB v5e/v6e, 64 MiB/TC v7x)."""
    try:
        return int(pltpu.get_tpu_info().vmem_capacity_bytes)
    except Exception:
        return 64 * _MIB  # conservative: v7x per-TensorCore VMEM


# --------------------------------------------------------------------------- #
# Parameter preparation (one-time; hoisted out of the per-call forward path)  #
# --------------------------------------------------------------------------- #
def prepare_params(params, compute_dtype=jnp.float32):
    """Pad weights/biases lane-dense (multiples of 128) and cast once.

    Zero padding is numerically exact; padded columns are sliced off the
    output in the wrapper.  Returns (padded_params, dims, dims_padded).
    On v6e/v7x, compute_dtype=jnp.bfloat16 is recommended (MXU throughput,
    half the weight DMA bytes); keep f32 on v5e or when exactness matters.
    """
    dims = [params[0][0].shape[0]] + [w.shape[1] for (w, _) in params]
    dims_p = [_round_up(d, _LANE) for d in dims]
    padded = []
    for li, (w, b) in enumerate(params):
        ki, ko = dims_p[li], dims_p[li + 1]
        w_p = jnp.pad(w, ((0, ki - w.shape[0]), (0, ko - w.shape[1])))
        w_p = w_p.astype(compute_dtype)
        b_p = jnp.pad(b, (0, ko - b.shape[0])).reshape(1, ko).astype(jnp.float32)
        padded.append((w_p, b_p))
    return padded, tuple(dims), tuple(dims_p)


# --------------------------------------------------------------------------- #
# Fused kernel: all layers in one pallas_call, intermediates never hit HBM    #
# --------------------------------------------------------------------------- #
def _mlp_fused_kernel(x_ref, *refs, num_layers: int):
    """refs = (w1, b1, ..., wN, bN, out_ref).

    x_ref: (tile_m, D0_pad) compute dtype
    w_i:   (Di_pad, Di+1_pad) compute dtype (whole array, VMEM resident)
    b_i:   (1, Di+1_pad) f32
    out:   (tile_m, DN_pad)
    """
    out_ref = refs[-1]
    h = x_ref[...]
    for i in range(num_layers):
        w_ref = refs[2 * i]
        b_ref = refs[2 * i + 1]
        # MXU matmul with f32 accumulation; bias-add (+ReLU) on the VPU in f32.
        acc = jnp.dot(h, w_ref[...], preferred_element_type=jnp.float32)
        acc = acc + b_ref[...].astype(jnp.float32)
        if i < num_layers - 1:
            acc = jnp.maximum(acc, 0.0)
            h = acc.astype(w_ref.dtype)  # back to compute dtype for next dot
        else:
            h = acc
    out_ref[...] = h.astype(out_ref.dtype)


# --------------------------------------------------------------------------- #
# Per-layer fallback: tiled matmul with K as trailing "arbitrary" grid axis   #
# --------------------------------------------------------------------------- #
def _linear_kernel(x_ref, w_ref, b_ref, o_ref, acc_ref, *, apply_relu: bool):
    @pl.when(pl.program_id(2) == 0)
    def _():
        acc_ref[...] = jnp.zeros_like(acc_ref)

    acc_ref[...] += jnp.dot(x_ref[...], w_ref[...],
                            preferred_element_type=jnp.float32)

    @pl.when(pl.program_id(2) == pl.num_programs(2) - 1)
    def _():
        out = acc_ref[...] + b_ref[...].astype(jnp.float32)
        if apply_relu:
            out = jnp.maximum(out, 0.0)
        o_ref[...] = out.astype(o_ref.dtype)


def _linear_pallas(x_p, w_p, b_p, *, apply_relu, out_dtype, vmem_cap):
    M, K = x_p.shape
    N = w_p.shape[1]
    cb = x_p.dtype.itemsize
    sub = 16 if cb == 2 else 8
    tm = min(512, _round_up(M, sub))
    tn = min(512, N)   # N, K are 128-multiples (prefer 256/512 on v6e/v7x MXU)
    tk = min(512, K)
    grid = (pl.cdiv(M, tm), pl.cdiv(N, tn), pl.cdiv(K, tk))

    ob = jnp.dtype(out_dtype).itemsize
    est = (2 * (tm * tk * cb + tk * tn * cb + 8 * tn * 4 + tm * tn * ob)
           + tm * tn * 4)
    vmem_limit = int(min(0.9 * vmem_cap, max(32 * _MIB, 1.25 * est)))

    return pl.pallas_call(
        functools.partial(_linear_kernel, apply_relu=apply_relu),
        out_shape=jax.ShapeDtypeStruct((M, N), out_dtype),
        grid=grid,
        in_specs=[
            pl.BlockSpec((tm, tk), lambda i, j, k: (i, k)),
            pl.BlockSpec((tk, tn), lambda i, j, k: (k, j)),
            pl.BlockSpec((1, tn), lambda i, j, k: (0, j)),
        ],
        out_specs=pl.BlockSpec((tm, tn), lambda i, j, k: (i, j)),
        scratch_shapes=[pltpu.VMEM((tm, tn), jnp.float32)],
        compiler_params=pltpu.CompilerParams(
            dimension_semantics=("parallel", "parallel", "arbitrary"),
            vmem_limit_bytes=vmem_limit,
        ),
    )(x_p, w_p, b_p)


# --------------------------------------------------------------------------- #
# Forward wrapper                                                             #
# --------------------------------------------------------------------------- #
def mlp_forward(padded_params, x, out_dim, *, out_dtype=jnp.float32,
                row_tile_cap=512, force_per_layer=False):
    """Fused MLP forward. ReLU on all layers except the last.

    padded_params: output of prepare_params (pre-padded, pre-cast).
    x: (..., input_dim) array; out_dim: true (unpadded) output width.
    """
    num_layers = len(padded_params)
    orig_shape = x.shape
    in_dim = orig_shape[-1]
    x2d = x.reshape(-1, in_dim)
    M = x2d.shape[0]

    dims_p = [padded_params[0][0].shape[0]] + \
             [w.shape[1] for (w, _) in padded_params]
    compute_dtype = jnp.dtype(padded_params[0][0].dtype)
    cb = compute_dtype.itemsize
    ob = jnp.dtype(out_dtype).itemsize
    sub = 16 if cb == 2 else 8   # bf16 packs 16 rows per vreg

    # --- lane-pad + cast x (one fused pass; skipped when already aligned) ----
    x_p = x2d
    if dims_p[0] != in_dim:
        x_p = jnp.pad(x_p, ((0, 0), (0, dims_p[0] - in_dim)))
    if x_p.dtype != compute_dtype:
        x_p = x_p.astype(compute_dtype)

    # --- row tiling (no row padding; edge tile handled by Pallas masking) ----
    tile_m = max(sub, min(row_tile_cap, _round_up(M, sub)))
    # v7x has 2 TensorCores: ensure >= 2 row tiles when M is large enough.
    if pl.cdiv(M, tile_m) < 2 and M >= 2 * sub:
        tile_m = _round_up(pl.cdiv(M, 2), sub)

    # --- VMEM budget (tight estimate: single-buffered resident weights) ------
    cap = _vmem_capacity_bytes()
    wbytes = sum(dims_p[i] * dims_p[i + 1] for i in range(num_layers)) * cb
    bbytes = sum(8 * dims_p[i + 1] * 4 for i in range(num_layers))

    def fused_est(tm):
        est = 2 * tm * dims_p[0] * cb          # x tiles (double-buffered)
        est += 2 * tm * dims_p[-1] * ob        # out tiles (double-buffered)
        est += wbytes + bbytes                 # resident weights, single buffer
        est += 3 * tm * max(dims_p) * 4        # live f32 intermediates headroom
        return est

    while fused_est(tile_m) > 0.8 * cap and tile_m > sub:
        tile_m = max(sub, _round_up(tile_m // 2, sub))

    use_fused = (not force_per_layer) and fused_est(tile_m) <= 0.8 * cap

    if use_fused:
        num_row_tiles = pl.cdiv(M, tile_m)
        flat_inputs = [x_p]
        in_specs = [pl.BlockSpec((tile_m, dims_p[0]), lambda i: (i, 0))]
        for (w_p, b_p) in padded_params:
            flat_inputs += [w_p, b_p]
            # Untiled whole-array VMEM residency: DMA'd once, single-buffered,
            # shared across all row tiles (half the VMEM of the default
            # double-buffered pipeline with a constant index_map).
            in_specs += [
                pl.BlockSpec(memory_space=pltpu.MemorySpace.VMEM),
                pl.BlockSpec(memory_space=pltpu.MemorySpace.VMEM),
            ]
        out_spec = pl.BlockSpec((tile_m, dims_p[-1]), lambda i: (i, 0))

        est = fused_est(tile_m)
        vmem_limit = int(min(0.9 * cap, max(32 * _MIB, 1.25 * est)))

        flops = 2 * M * sum(dims_p[i] * dims_p[i + 1] for i in range(num_layers))
        bytes_accessed = (M * dims_p[0] * cb + wbytes + bbytes
                          + M * dims_p[-1] * ob)

        kernel = functools.partial(_mlp_fused_kernel, num_layers=num_layers)
        out_p = pl.pallas_call(
            kernel,
            out_shape=jax.ShapeDtypeStruct((M, dims_p[-1]), out_dtype),
            grid=(num_row_tiles,),
            in_specs=in_specs,
            out_specs=out_spec,
            compiler_params=pltpu.CompilerParams(
                dimension_semantics=("parallel",),
                vmem_limit_bytes=vmem_limit,
            ),
            cost_estimate=pl.CostEstimate(
                flops=int(flops), transcendentals=0,
                bytes_accessed=int(bytes_accessed)),
        )(*flat_inputs)
    else:
        # Weight-streaming fallback (v7x: resident weights too large for VMEM):
        # per-layer tiled matmul, K streamed as the trailing grid axis.
        h = x_p
        for li, (w_p, b_p) in enumerate(padded_params):
            last = li == num_layers - 1
            h = _linear_pallas(h, w_p, b_p, apply_relu=not last,
                               out_dtype=out_dtype if last else compute_dtype,
                               vmem_cap=cap)
        out_p = h

    out = out_p if dims_p[-1] == out_dim else out_p[:, :out_dim]
    return out.reshape(*orig_shape[:-1], out_dim)


# --------------------------------------------------------------------------- #
# Init + reference                                                            #
# --------------------------------------------------------------------------- #
def init_mlp_params(key, input_dim, hidden_dim, output_dim, num_layers):
    """Deterministic init mirroring nn.Linear shapes (weight stored as (in, out))."""
    h = [hidden_dim] * (num_layers - 1)
    dims_in = [input_dim] + h
    dims_out = h + [output_dim]
    params = []
    for n, k in zip(dims_in, dims_out):
        key, kw, kb = jax.random.split(key, 3)
        bound = 1.0 / jnp.sqrt(n)  # PyTorch default Linear init range
        w = jax.random.uniform(kw, (n, k), jnp.float32, -bound, bound)
        b = jax.random.uniform(kb, (k,), jnp.float32, -bound, bound)
        params.append((w, b))
    return params


def mlp_reference(params, x):
    """Plain-JAX reference for correctness checking."""
    orig_shape = x.shape
    x2d = x.reshape(-1, orig_shape[-1])
    num_layers = len(params)
    for i, (w, b) in enumerate(params):
        x2d = x2d @ w + b
        if i < num_layers - 1:
            x2d = jnp.maximum(x2d, 0.0)
    return x2d.reshape(*orig_shape[:-1], params[-1][0].shape[1])


if __name__ == "__main__":
    # MLP(input_dim=32, hidden_dim=64, output_dim=16, num_layers=3), (2, 8) tokens.
    input_dim, hidden_dim, output_dim, num_layers = 32, 64, 16, 3
    batch, seq = 2, 8

    key = jax.random.PRNGKey(0)
    key_x, key_p = jax.random.split(key)
    x = jax.random.normal(key_x, (batch, seq, input_dim), jnp.float32)
    params = init_mlp_params(key_p, input_dim, hidden_dim, output_dim, num_layers)
    ref = mlp_reference(params, x)

    # --- f32 fused path: tight check against the reference -------------------
    pad_f32, _, _ = prepare_params(params, jnp.float32)     # one-time pad+cast
    fwd_f32 = jax.jit(lambda p, a: mlp_forward(p, a, output_dim))
    out = jax.block_until_ready(fwd_f32(pad_f32, x))
    assert out.shape == (batch, seq, output_dim), out.shape
    assert jnp.allclose(out, ref, atol=1e-4, rtol=1e-4), "f32 fused mismatch"

    # --- bf16 fused path (recommended on v6e/v7x): looser tolerance ----------
    pad_bf16, _, _ = prepare_params(params, jnp.bfloat16)
    fwd_bf16 = jax.jit(lambda p, a: mlp_forward(p, a, output_dim))
    out_bf16 = jax.block_until_ready(fwd_bf16(pad_bf16, x))
    assert out_bf16.shape == (batch, seq, output_dim), out_bf16.shape
    assert jnp.allclose(out_bf16, ref, atol=5e-2, rtol=5e-2), "bf16 fused mismatch"

    # --- per-layer streamed fallback (v7x path for weights > VMEM) -----------
    fwd_fb = jax.jit(lambda p, a: mlp_forward(p, a, output_dim,
                                              force_per_layer=True))
    out_fb = jax.block_until_ready(fwd_fb(pad_f32, x))
    assert out_fb.shape == (batch, seq, output_dim), out_fb.shape
    assert jnp.allclose(out_fb, ref, atol=1e-4, rtol=1e-4), "fallback mismatch"

    print("KERNEL_OK")
</pallas_src>

<mosaic_0001>
module attributes {stable_mosaic.version = 11 : i64} {
  func.func @_mlp_fused_kernel(%arg0: i32, %arg1: memref<8x128xf32, #tpu.memory_space<vmem>>, %arg2: memref<128x128xf32, #tpu.memory_space<vmem>>, %arg3: memref<1x128xf32, #tpu.memory_space<vmem>>, %arg4: memref<128x128xf32, #tpu.memory_space<vmem>>, %arg5: memref<1x128xf32, #tpu.memory_space<vmem>>, %arg6: memref<128x128xf32, #tpu.memory_space<vmem>>, %arg7: memref<1x128xf32, #tpu.memory_space<vmem>>, %arg8: memref<8x128xf32, #tpu.memory_space<vmem>>) attributes {dimension_semantics = [#tpu.dimension_semantics<parallel>], iteration_bounds = array<i64: 2>, scalar_prefetch = 0 : i64, scratch_operands = 0 : i64, tpu.core_type = #tpu.core_type<tc>, window_params = [{transform_indices = @transform_0, window_bounds = array<i64: 8, 128>}, {pipeline_mode = #tpu.pipeline_mode<synchronous>, transform_indices = @transform_1, window_bounds = array<i64: 128, 128>}, {pipeline_mode = #tpu.pipeline_mode<synchronous>, transform_indices = @transform_2, window_bounds = array<i64: 1, 128>}, {pipeline_mode = #tpu.pipeline_mode<synchronous>, transform_indices = @transform_3, window_bounds = array<i64: 128, 128>}, {pipeline_mode = #tpu.pipeline_mode<synchronous>, transform_indices = @transform_4, window_bounds = array<i64: 1, 128>}, {pipeline_mode = #tpu.pipeline_mode<synchronous>, transform_indices = @transform_5, window_bounds = array<i64: 128, 128>}, {pipeline_mode = #tpu.pipeline_mode<synchronous>, transform_indices = @transform_6, window_bounds = array<i64: 1, 128>}, {transform_indices = @transform_7, window_bounds = array<i64: 8, 128>}]} {
    %c0 = arith.constant 0 : index
    %c0_0 = arith.constant 0 : index
    %0 = vector.load %arg1[%c0, %c0_0] : memref<8x128xf32, #tpu.memory_space<vmem>>, vector<8x128xf32>
    %c0_1 = arith.constant 0 : index
    %c0_2 = arith.constant 0 : index
    %1 = vector.load %arg2[%c0_1, %c0_2] : memref<128x128xf32, #tpu.memory_space<vmem>>, vector<128x128xf32>
    %cst = arith.constant dense<0.000000e+00> : vector<8x128xf32>
    %2 = tpu.matmul %0, %1, %cst {dimension_numbers = #tpu.dot_dimension_numbers<[1], [0], [0], [1], [0, 0, 1, 1], [], []>} : vector<8x128xf32>, vector<128x128xf32>, vector<8x128xf32> -> vector<8x128xf32>
    %c0_3 = arith.constant 0 : index
    %c0_4 = arith.constant 0 : index
    %3 = vector.load %arg3[%c0_3, %c0_4] : memref<1x128xf32, #tpu.memory_space<vmem>>, vector<1x128xf32>
    %4 = vector.broadcast %3 : vector<1x128xf32> to vector<8x128xf32>
    %5 = arith.addf %2, %4 : vector<8x128xf32>
    %cst_5 = arith.constant 0.000000e+00 : f32
    %6 = vector.broadcast %cst_5 : f32 to vector<8x128xf32>
    %7 = arith.maximumf %5, %6 : vector<8x128xf32>
    %c0_6 = arith.constant 0 : index
    %c0_7 = arith.constant 0 : index
    %8 = vector.load %arg4[%c0_6, %c0_7] : memref<128x128xf32, #tpu.memory_space<vmem>>, vector<128x128xf32>
    %cst_8 = arith.constant dense<0.000000e+00> : vector<8x128xf32>
    %9 = tpu.matmul %7, %8, %cst_8 {dimension_numbers = #tpu.dot_dimension_numbers<[1], [0], [0], [1], [0, 0, 1, 1], [], []>} : vector<8x128xf32>, vector<128x128xf32>, vector<8x128xf32> -> vector<8x128xf32>
    %c0_9 = arith.constant 0 : index
    %c0_10 = arith.constant 0 : index
    %10 = vector.load %arg5[%c0_9, %c0_10] : memref<1x128xf32, #tpu.memory_space<vmem>>, vector<1x128xf32>
    %11 = vector.broadcast %10 : vector<1x128xf32> to vector<8x128xf32>
    %12 = arith.addf %9, %11 : vector<8x128xf32>
    %cst_11 = arith.constant 0.000000e+00 : f32
    %13 = vector.broadcast %cst_11 : f32 to vector<8x128xf32>
    %14 = arith.maximumf %12, %13 : vector<8x128xf32>
    %c0_12 = arith.constant 0 : index
    %c0_13 = arith.constant 0 : index
    %15 = vector.load %arg6[%c0_12, %c0_13] : memref<128x128xf32, #tpu.memory_space<vmem>>, vector<128x128xf32>
    %cst_14 = arith.constant dense<0.000000e+00> : vector<8x128xf32>
    %16 = tpu.matmul %14, %15, %cst_14 {dimension_numbers = #tpu.dot_dimension_numbers<[1], [0], [0], [1], [0, 0, 1, 1], [], []>} : vector<8x128xf32>, vector<128x128xf32>, vector<8x128xf32> -> vector<8x128xf32>
    %c0_15 = arith.constant 0 : index
    %c0_16 = arith.constant 0 : index
    %17 = vector.load %arg7[%c0_15, %c0_16] : memref<1x128xf32, #tpu.memory_space<vmem>>, vector<1x128xf32>
    %18 = vector.broadcast %17 : vector<1x128xf32> to vector<8x128xf32>
    %19 = arith.addf %16, %18 : vector<8x128xf32>
    %c0_17 = arith.constant 0 : index
    %c0_18 = arith.constant 0 : index
    %20 = vector.load %arg8[%c0_17, %c0_18] : memref<8x128xf32, #tpu.memory_space<vmem>>, vector<8x128xf32>
    tpu.vector_store %arg8[%c0_17, %c0_18], %19 {strides = array<i32>} : memref<8x128xf32, #tpu.memory_space<vmem>>, vector<8x128xf32>,
    return
  }
  func.func @transform_0(%arg0: i32) -> (i32, i32) {
    %c0_i32 = arith.constant 0 : i32
    %c0_i32_0 = arith.constant 0 : i32
    return %arg0, %c0_i32 : i32, i32
  }
  func.func @transform_1(%arg0: i32) -> (i32, i32) {
    %c0_i32 = arith.constant 0 : i32
    %c0_i32_0 = arith.constant 0 : i32
    %c0_i32_1 = arith.constant 0 : i32
    return %c0_i32, %c0_i32_0 : i32, i32
  }
  func.func @transform_2(%arg0: i32) -> (i32, i32) {
    %c0_i32 = arith.constant 0 : i32
    %c0_i32_0 = arith.constant 0 : i32
    %c0_i32_1 = arith.constant 0 : i32
    return %c0_i32, %c0_i32_0 : i32, i32
  }
  func.func @transform_3(%arg0: i32) -> (i32, i32) {
    %c0_i32 = arith.constant 0 : i32
    %c0_i32_0 = arith.constant 0 : i32
    %c0_i32_1 = arith.constant 0 : i32
    return %c0_i32, %c0_i32_0 : i32, i32
  }
  func.func @transform_4(%arg0: i32) -> (i32, i32) {
    %c0_i32 = arith.constant 0 : i32
    %c0_i32_0 = arith.constant 0 : i32
    %c0_i32_1 = arith.constant 0 : i32
    return %c0_i32, %c0_i32_0 : i32, i32
  }
  func.func @transform_5(%arg0: i32) -> (i32, i32) {
    %c0_i32 = arith.constant 0 : i32
    %c0_i32_0 = arith.constant 0 : i32
    %c0_i32_1 = arith.constant 0 : i32
    return %c0_i32, %c0_i32_0 : i32, i32
  }
  func.func @transform_6(%arg0: i32) -> (i32, i32) {
    %c0_i32 = arith.constant 0 : i32
    %c0_i32_0 = arith.constant 0 : i32
    %c0_i32_1 = arith.constant 0 : i32
    return %c0_i32, %c0_i32_0 : i32, i32
  }
  func.func @transform_7(%arg0: i32) -> (i32, i32) {
    %c0_i32 = arith.constant 0 : i32
    %c0_i32_0 = arith.constant 0 : i32
    return %arg0, %c0_i32 : i32, i32
  }
}

</mosaic_0001>

<llo_original>
// kernel: _lambda_.1
$region0: #{_lambda_.1}
  #allocation0 [shape = 'u32[]', space=smem, size = 0x4, offset = 0x4, fixed_abs, tag = 'smem constant byte address 0x4 - core index']
  #allocation1 [shape = 'u32[72,128]{1,0:T(1,128)}', space=vmem, size = 0x9000, scoped, tag = 'internal scratch']
  %s0 = inlined_call_operand.vmem [shape: f32[16,128], index: 0, kind: input, shape index: {}]
  %s1 = inlined_call_operand.hbm [shape: f32[128,128], index: 1, kind: input, shape index: {}]
  %s2 = inlined_call_operand.vmem [shape: f32[1,128], index: 2, kind: input, shape index: {}]
  %s3 = inlined_call_operand.hbm [shape: f32[128,128], index: 3, kind: input, shape index: {}]
  %s4 = inlined_call_operand.vmem [shape: f32[1,128], index: 4, kind: input, shape index: {}]
  %s5 = inlined_call_operand.hbm [shape: f32[128,128], index: 5, kind: input, shape index: {}]
  %s6 = inlined_call_operand.vmem [shape: f32[1,128], index: 6, kind: input, shape index: {}]
  %s7 = inlined_call_operand.vmem [shape: f32[16,128], index: 7, kind: output, shape index: {}]
  %s8 = sld [smem:[#allocation0]]
  $region73: #{_lambda_.1} parent=0
    _
  %s10 = ssub.s32 1, %s8
  %s11 = scalar_select 0, %s10, %s8
  $region1: #{_lambda_.1} parent=0
    #allocation2 [shape = 'u8[65536]{0}', space=vmem, size = 0x10000, scoped, tag = 'input window, operand 1, single buffered']
    #allocation3 [shape = 's32[2]{0}', space=sflag, size = 0x8, scoped, tag = 'scoped memory for _lambda_.1']
    #allocation4 [shape = 'u8[65536]{0}', space=vmem, size = 0x10000, scoped, tag = 'input window, operand 3, single buffered']
    #allocation5 [shape = 's32[1]{0}', space=sflag, size = 0x4, scoped, tag = 'scoped memory for _lambda_.1']
    #allocation6 [shape = 'u8[65536]{0}', space=vmem, size = 0x10000, scoped, tag = 'input window, operand 5, single buffered']
    %12 = vsyncpa [#allocation3], 0
    %13 = vsyncpa [#allocation5], 0
    loop: start=0, step=1, limit=4
    $region2: #{_lambda_.1} parent=1 // loop_pre_header
      _
    $region3: #{_lambda_.1} parent=1 // loop_header
      %s15 = sphi 0, %s19
      %p16 = scmp.ge.s32.totalorder %s15, 4
      %s25 = sphi 0, %s27
      %s28 = sphi 0, %s25
      %s29 = sphi 0, %s28
      %s45 = sphi 0, %s29
      %s49 = sphi 0, %s49
      %s51 = sphi 0, %s49
      %s52 = sphi 0, %s51
      %s66 = sphi 0, %s52
      %s70 = sphi 0, %s70
      %s72 = sphi 0, %s70
      %s73 = sphi 0, %s72
      %s87 = sphi 0, %s73
      %s91 = sphi 0, %s91
      %s93 = sphi 0, %s91
      %s94 = sphi 0, %s93
      %s108 = sphi 0, %s94
      %s112 = sphi 0, %s112
      %s114 = sphi 0, %s112
      %s115 = sphi 0, %s114
      %s129 = sphi 0, %s115
      %s133 = sphi 0, %s133
      %s135 = sphi 0, %s133
      %s136 = sphi 0, %s135
      %s150 = sphi 0, %s136
      %s154 = sphi 0, %s154
      %s156 = sphi 0, %s154
      %s157 = sphi 0, %s156
      %s171 = sphi 0, %s157
      %s177 = sphi 0, %s179
      %s180 = sphi 0, %s177
      %s181 = sphi 0, %s180
      %s197 = sphi 0, %s181
    $region4: #{_lambda_.1} parent=1 // loop_header_branch
      %18 = sbr.rel (%p16) target = $region8
    $region5: #{_lambda_.1} parent=1 // loop_body
      %s20 = ssub.s32 %s15, 1
      %s21 = ssub.s32 %s15, 2
      %s22 = sadd.s32 %s15, 1
      %s23 = ssub.s32 %s15, %s22
      %p24 = scmp.eq.s32.totalorder %s23, 0
      %s26 = sadd.s32 %s25, 1
      %s27 = scalar_select %p24, %s25, %s26
      %p30 = pneg %p24
      %p31 = scmp.eq.s32.totalorder %s15, 1
      %p32 = por %p30, %p31
      %p33 = scmp.ne.s32.totalorder %s25, %s28
      %p34 = scmp.eq.s32.totalorder %s15, 0
      %p35 = por %p33, %p34
      %p36 = scmp.ne.s32.totalorder %s25, %s28
      %p37 = scmp.eq.s32.totalorder %s20, 1
      %p38 = por %p36, %p37
      %p39 = scmp.ne.s32.totalorder %s28, %s29
      %p40 = scmp.eq.s32.totalorder %s20, 0
      %p41 = por %p39, %p40
      %p42 = scmp.ne.s32.totalorder %s28, %s29
      %p43 = scmp.eq.s32.totalorder %s21, 1
      %p44 = por %p42, %p43
      %p46 = scmp.ne.s32.totalorder %s29, %s45
      %p47 = scmp.eq.s32.totalorder %s21, 0
      %p48 = por %p46, %p47
      %s50 = sadd.s32 %s49, 1
      %p53 = scmp.eq.s32.totalorder %s15, 1
      %p54 = scmp.ne.s32.totalorder %s49, %s51
      %p55 = scmp.eq.s32.totalorder %s15, 0
      %p56 = por %p54, %p55
      %p57 = scmp.ne.s32.totalorder %s49, %s51
      %p58 = scmp.eq.s32.totalorder %s20, 1
      %p59 = por %p57, %p58
      %p60 = scmp.ne.s32.totalorder %s51, %s52
      %p61 = scmp.eq.s32.totalorder %s20, 0
      %p62 = por %p60, %p61
      %p63 = scmp.ne.s32.totalorder %s51, %s52
      %p64 = scmp.eq.s32.totalorder %s21, 1
      %p65 = por %p63, %p64
      %p67 = scmp.ne.s32.totalorder %s52, %s66
      %p68 = scmp.eq.s32.totalorder %s21, 0
      %p69 = por %p67, %p68
      %s71 = sadd.s32 %s70, 1
      %p74 = scmp.eq.s32.totalorder %s15, 1
      %p75 = scmp.ne.s32.totalorder %s70, %s72
      %p76 = scmp.eq.s32.totalorder %s15, 0
      %p77 = por %p75, %p76
      %p78 = scmp.ne.s32.totalorder %s70, %s72
      %p79 = scmp.eq.s32.totalorder %s20, 1
      %p80 = por %p78, %p79
      %p81 = scmp.ne.s32.totalorder %s72, %s73
      %p82 = scmp.eq.s32.totalorder %s20, 0
      %p83 = por %p81, %p82
      %p84 = scmp.ne.s32.totalorder %s72, %s73
      %p85 = scmp.eq.s32.totalorder %s21, 1
      %p86 = por %p84, %p85
      %p88 = scmp.ne.s32.totalorder %s73, %s87
      %p89 = scmp.eq.s32.totalorder %s21, 0
      %p90 = por %p88, %p89
      %s92 = sadd.s32 %s91, 1
      %p95 = scmp.eq.s32.totalorder %s15, 1
      %p96 = scmp.ne.s32.totalorder %s91, %s93
      %p97 = scmp.eq.s32.totalorder %s15, 0
      %p98 = por %p96, %p97
      %p99 = scmp.ne.s32.totalorder %s91, %s93
      %p100 = scmp.eq.s32.totalorder %s20, 1
      %p101 = por %p99, %p100
      %p102 = scmp.ne.s32.totalorder %s93, %s94
      %p103 = scmp.eq.s32.totalorder %s20, 0
      %p104 = por %p102, %p103
      %p105 = scmp.ne.s32.totalorder %s93, %s94
      %p106 = scmp.eq.s32.totalorder %s21, 1
      %p107 = por %p105, %p106
      %p109 = scmp.ne.s32.totalorder %s94, %s108
      %p110 = scmp.eq.s32.totalorder %s21, 0
      %p111 = por %p109, %p110
      %s113 = sadd.s32 %s112, 1
      %p116 = scmp.eq.s32.totalorder %s15, 1
      %p117 = scmp.ne.s32.totalorder %s112, %s114
      %p118 = scmp.eq.s32.totalorder %s15, 0
      %p119 = por %p117, %p118
      %p120 = scmp.ne.s32.totalorder %s112, %s114
      %p121 = scmp.eq.s32.totalorder %s20, 1
      %p122 = por %p120, %p121
      %p123 = scmp.ne.s32.totalorder %s114, %s115
      %p124 = scmp.eq.s32.totalorder %s20, 0
      %p125 = por %p123, %p124
      %p126 = scmp.ne.s32.totalorder %s114, %s115
      %p127 = scmp.eq.s32.totalorder %s21, 1
      %p128 = por %p126, %p127
      %p130 = scmp.ne.s32.totalorder %s115, %s129
      %p131 = scmp.eq.s32.totalorder %s21, 0
      %p132 = por %p130, %p131
      %s134 = sadd.s32 %s133, 1
      %p137 = scmp.eq.s32.totalorder %s15, 1
      %p138 = scmp.ne.s32.totalorder %s133, %s135
      %p139 = scmp.eq.s32.totalorder %s15, 0
      %p140 = por %p138, %p139
      %p141 = scmp.ne.s32.totalorder %s133, %s135
      %p142 = scmp.eq.s32.totalorder %s20, 1
      %p143 = por %p141, %p142
      %p144 = scmp.ne.s32.totalorder %s135, %s136
      %p145 = scmp.eq.s32.totalorder %s20, 0
      %p146 = por %p144, %p145
      %p147 = scmp.ne.s32.totalorder %s135, %s136
      %p148 = scmp.eq.s32.totalorder %s21, 1
      %p149 = por %p147, %p148
      %p151 = scmp.ne.s32.totalorder %s136, %s150
      %p152 = scmp.eq.s32.totalorder %s21, 0
      %p153 = por %p151, %p152
      %s155 = sadd.s32 %s154, 1
      %p158 = scmp.eq.s32.totalorder %s15, 1
      %p159 = scmp.ne.s32.totalorder %s154, %s156
      %p160 = scmp.eq.s32.totalorder %s15, 0
      %p161 = por %p159, %p160
      %p162 = scmp.ne.s32.totalorder %s154, %s156
      %p163 = scmp.eq.s32.totalorder %s20, 1
      %p164 = por %p162, %p163
      %p165 = scmp.ne.s32.totalorder %s156, %s157
      %p166 = scmp.eq.s32.totalorder %s20, 0
      %p167 = por %p165, %p166
      %p168 = scmp.ne.s32.totalorder %s156, %s157
      %p169 = scmp.eq.s32.totalorder %s21, 1
      %p170 = por %p168, %p169
      %p172 = scmp.ne.s32.totalorder %s157, %s171
      %p173 = scmp.eq.s32.totalorder %s21, 0
      %p174 = por %p172, %p173
      %s175 = ssub.s32 %s15, %s22
      %p176 = scmp.eq.s32.totalorder %s175, 0
      %s178 = sadd.s32 %s177, 1
      %s179 = scalar_select %p176, %s177, %s178
      %p182 = pneg %p176
      %p183 = scmp.eq.s32.totalorder %s15, 1
      %p184 = por %p182, %p183
      %p185 = scmp.ne.s32.totalorder %s177, %s180
      %p186 = scmp.eq.s32.totalorder %s15, 0
      %p187 = por %p185, %p186
      %p188 = scmp.ne.s32.totalorder %s177, %s180
      %p189 = scmp.eq.s32.totalorder %s20, 1
      %p190 = por %p188, %p189
      %p191 = scmp.ne.s32.totalorder %s180, %s181
      %p192 = scmp.eq.s32.totalorder %s20, 0
      %p193 = por %p191, %p192
      %p194 = scmp.ne.s32.totalorder %s180, %s181
      %p195 = scmp.eq.s32.totalorder %s21, 1
      %p196 = por %p194, %p195
      %p198 = scmp.ne.s32.totalorder %s181, %s197
      %p199 = scmp.eq.s32.totalorder %s21, 0
      %p200 = por %p198, %p199
      %p201 = scmp.le.s32.totalorder 1, %s15
      %p202 = scmp.lt.s32.totalorder %s15, 3
      %p203 = pnand %p201, %p202
      %p204 = pneg %p203
      // Predicated region
      $region9: #{_lambda_.1} parent=5 // pred_check
        _
      $region10: #{_lambda_.1} parent=5 // pred_check_branch
        %206 = sbr.rel (%p203) target = $region12
      $region11: #{_lambda_.1} parent=5 // pred_region
        %s207 = ssub.s32 %s15, 1
        // Predicated region
        $region13: #{_lambda_.1} parent=11 // pred_check
          %p208 = pneg %p62
        $region14: #{_lambda_.1} parent=11 // pred_check_branch
          %210 = sbr.rel (%p208) target = $region16
        $region15: #{_lambda_.1} parent=11 // pred_region
          %212 = vsyncadd [#allocation3], 0
          %s213 = sshll.u32 %s1, 4
          %s214 = int_to_ptr.hbm [resolvable:$true] %s213
          %s215 = sshll.u32 [#allocation2], 4
          %s216 = int_to_ptr.vmem [resolvable:$true] %s215
          %221 = dma.hbm_to_vmem [thread:$0]  %s214, 2048, %s216, [#allocation3], 128, 128, 8
        $region16: #{_lambda_.1} parent=11 // pred_fallthru
          _
        // Predicated region
        $region17: #{_lambda_.1} parent=11 // pred_check
          %p222 = pneg %p83
        $region18: #{_lambda_.1} parent=11 // pred_check_branch
          %224 = sbr.rel (%p222) target = $region20
        $region19: #{_lambda_.1} parent=11 // pred_region
          _
        $region20: #{_lambda_.1} parent=11 // pred_fallthru
          _
        // Predicated region
        $region21: #{_lambda_.1} parent=11 // pred_check
          %p225 = pneg %p104
        $region22: #{_lambda_.1} parent=11 // pred_check_branch
          %227 = sbr.rel (%p225) target = $region24
        $region23: #{_lambda_.1} parent=11 // pred_region
          %229 = vsyncadd [#allocation5], 0
          %s230 = sshll.u32 %s3, 4
          %s231 = int_to_ptr.hbm [resolvable:$true] %s230
          %s232 = sshll.u32 [#allocation4], 4
          %s233 = int_to_ptr.vmem [resolvable:$true] %s232
          %238 = dma.hbm_to_vmem [thread:$0]  %s231, 2048, %s233, [#allocation5], 128, 128, 8
        $region24: #{_lambda_.1} parent=11 // pred_fallthru
          _
        // Predicated region
        $region25: #{_lambda_.1} parent=11 // pred_check
          %p239 = pneg %p125
        $region26: #{_lambda_.1} parent=11 // pred_check_branch
          %241 = sbr.rel (%p239) target = $region28
        $region27: #{_lambda_.1} parent=11 // pred_region
          _
        $region28: #{_lambda_.1} parent=11 // pred_fallthru
          _
        // Predicated region
        $region29: #{_lambda_.1} parent=11 // pred_check
          %p242 = pneg %p146
        $region30: #{_lambda_.1} parent=11 // pred_check_branch
          %244 = sbr.rel (%p242) target = $region32
        $region31: #{_lambda_.1} parent=11 // pred_region
          %246 = vsyncadd [#allocation5], 0
          %s247 = sshll.u32 %s5, 4
          %s248 = int_to_ptr.hbm [resolvable:$true] %s247
          %s249 = sshll.u32 [#allocation6], 4
          %s250 = int_to_ptr.vmem [resolvable:$true] %s249
          %255 = dma.hbm_to_vmem [thread:$0]  %s248, 2048, %s250, [#allocation5], 128, 128, 8
        $region32: #{_lambda_.1} parent=11 // pred_fallthru
          _
        // Predicated region
        $region33: #{_lambda_.1} parent=11 // pred_check
          %p256 = pneg %p167
        $region34: #{_lambda_.1} parent=11 // pred_check_branch
          %258 = sbr.rel (%p256) target = $region36
        $region35: #{_lambda_.1} parent=11 // pred_region
          _
        $region36: #{_lambda_.1} parent=11 // pred_fallthru
          _
      $region12: #{_lambda_.1} parent=5 // pred_fallthru
        _
      %p259 = scmp.lt.s32.totalorder %s15, 2
      // Predicated region
      $region37: #{_lambda_.1} parent=5 // pred_check
        %p260 = pneg %p259
      $region38: #{_lambda_.1} parent=5 // pred_check_branch
        %262 = sbr.rel (%p260) target = $region40
      $region39: #{_lambda_.1} parent=5 // pred_region
        // Predicated region
        $region41: #{_lambda_.1} parent=39 // pred_check
          %p263 = pneg %p35
        $region42: #{_lambda_.1} parent=39 // pred_check_branch
          %265 = sbr.rel (%p263) target = $region44
        $region43: #{_lambda_.1} parent=39 // pred_region
          %p266 = scmp.lt.s32.totalorder %s15, 1
          %s267 = scalar_select %p266, %s15, 1
          %s268 = smul.addr %s267, 8
          %s269 = scalar_lea.vmem %s0, %s268
        $region44: #{_lambda_.1} parent=39 // pred_fallthru
          _
      $region40: #{_lambda_.1} parent=5 // pred_fallthru
        _
      %p270 = scmp.le.s32.totalorder 1, %s15
      %p271 = scmp.lt.s32.totalorder %s15, 3
      %p272 = pnand %p270, %p271
      %p273 = pneg %p272
      // Predicated region
      $region45: #{_lambda_.1} parent=5 // pred_check
        _
      $region46: #{_lambda_.1} parent=5 // pred_check_branch
        %275 = sbr.rel (%p272) target = $region48
      $region47: #{_lambda_.1} parent=5 // pred_region
        %s276 = ssub.s32 %s15, 1
        // Predicated region
        $region49: #{_lambda_.1} parent=47 // pred_check
          %p277 = pneg %p62
        $region50: #{_lambda_.1} parent=47 // pred_check_branch
          %279 = sbr.rel (%p277) target = $region52
        $region51: #{_lambda_.1} parent=47 // pred_region
          %281 = dma.done [#allocation3], 2048
        $region52: #{_lambda_.1} parent=47 // pred_fallthru
          _
        // Predicated region
        $region53: #{_lambda_.1} parent=47 // pred_check
          %p282 = pneg %p104
        $region54: #{_lambda_.1} parent=47 // pred_check_branch
          %284 = sbr.rel (%p282) target = $region56
        $region55: #{_lambda_.1} parent=47 // pred_region
          %286 = dma.done [#allocation5], 2048
        $region56: #{_lambda_.1} parent=47 // pred_fallthru
          _
        // Predicated region
        $region57: #{_lambda_.1} parent=47 // pred_check
          %p287 = pneg %p146
        $region58: #{_lambda_.1} parent=47 // pred_check_branch
          %289 = sbr.rel (%p287) target = $region60
        $region59: #{_lambda_.1} parent=47 // pred_region
          %291 = dma.done [#allocation5], 2048
        $region60: #{_lambda_.1} parent=47 // pred_fallthru
          _
        %p292 = scmp.lt.s32.totalorder %s20, 1
        %s293 = scalar_select %p292, %s20, 1
        %s294 = smul.addr %s293, 8
        %s295 = scalar_lea.vmem %s0, %s294
        %p296 = pneg %p41
        %p297 = pneg %p38
        %p298 = pneg %p62
        %p299 = pneg %p59
        %p300 = pneg %p83
        %p301 = pneg %p80
        %p302 = pneg %p104
        %p303 = pneg %p101
        %p304 = pneg %p125
        %p305 = pneg %p122
        %p306 = pneg %p146
        %p307 = pneg %p143
        %p308 = pneg %p167
        %p309 = pneg %p164
        %p310 = pneg %p193
        %p311 = pneg %p190
        %p312 = scmp.lt.s32.totalorder %s20, 1
        %s313 = scalar_select %p312, %s20, 1
        %s314 = smul.addr %s313, 8
        %s315 = scalar_lea.vmem %s7, %s314
        %p316 = scmp.lt.s32.totalorder %s20, 1
        %s317 = scalar_select %p316, %s20, 1
        %s318 = smul.addr %s317, 8
        %s319 = scalar_lea.vmem %s0, %s318
        %p320 = scmp.lt.s32.totalorder %s20, 1
        %s321 = scalar_select %p320, %s20, 1
        %s322 = smul.addr %s321, 8
        %s323 = scalar_lea.vmem %s7, %s322
        %v324 = vld [vmem:[%s319] sm:$0xff]
        %v325 = vld [vmem:[#allocation2] sm:$0xff]
        %v326 = vld [vmem:[#allocation2 + $0x8] sm:$0xff]
        %v327 = vld [vmem:[#allocation2 + $0x10] sm:$0xff]
        %v328 = vld [vmem:[#allocation2 + $0x18] sm:$0xff]
        %v329 = vld [vmem:[#allocation2 + $0x20] sm:$0xff]
        %v330 = vld [vmem:[#allocation2 + $0x28] sm:$0xff]
        %v331 = vld [vmem:[#allocation2 + $0x30] sm:$0xff]
        %v332 = vld [vmem:[#allocation2 + $0x38] sm:$0xff]
        %v333 = vld [vmem:[#allocation2 + $0x40] sm:$0xff]
        %v334 = vld [vmem:[#allocation2 + $0x48] sm:$0xff]
        %v335 = vld [vmem:[#allocation2 + $0x50] sm:$0xff]
        %v336 = vld [vmem:[#allocation2 + $0x58] sm:$0xff]
        %v337 = vld [vmem:[#allocation2 + $0x60] sm:$0xff]
        %v338 = vld [vmem:[#allocation2 + $0x68] sm:$0xff]
        %v339 = vld [vmem:[#allocation2 + $0x70] sm:$0xff]
        %v340 = vld [vmem:[#allocation2 + $0x78] sm:$0xff]
        %v341 = vld [vmem:[%s2] sm:$0x1]
        %v343 = vperm.slane %v341, 0
        %345 = vmatpush.msra.mxu0 %v340
        %346 = vmatpush.msra.mxu0 %v339
        %347 = vmatpush.msra.mxu0 %v338
        %348 = vmatpush.msra.mxu0 %v337
        %349 = vmatpush.msra.mxu0 %v336
        %350 = vmatpush.msra.mxu0 %v335
        %351 = vmatpush.msra.mxu0 %v334
        %352 = vmatpush.msra.mxu0 %v333
        %353 = vmatpush.msra.mxu0 %v332
        %354 = vmatpush.msra.mxu0 %v331
        %355 = vmatpush.msra.mxu0 %v330
        %356 = vmatpush.msra.mxu0 %v329
        %357 = vmatpush.msra.mxu0 %v328
        %358 = vmatpush.msra.mxu0 %v327
        %359 = vmatpush.msra.mxu0 %v326
        %360 = vmatpush.msra.mxu0 %v325
        %361 = vmatmul.f32.gmra.mxu0 %v324
        %v362 = vpop.f32.mrf.mxu0
        %v363 = vadd.f32 %v343, %v362
        %364 = vdwg.mxu0
        %v365 = vmax.f32 %v363, 0.0
        %v366 = vld [vmem:[#allocation4] sm:$0xff]
        %v367 = vld [vmem:[#allocation4 + $0x8] sm:$0xff]
        %v368 = vld [vmem:[#allocation4 + $0x10] sm:$0xff]
        %v369 = vld [vmem:[#allocation4 + $0x18] sm:$0xff]
        %v370 = vld [vmem:[#allocation4 + $0x20] sm:$0xff]
        %v371 = vld [vmem:[#allocation4 + $0x28] sm:$0xff]
        %v372 = vld [vmem:[#allocation4 + $0x30] sm:$0xff]
        %v373 = vld [vmem:[#allocation4 + $0x38] sm:$0xff]
        %v374 = vld [vmem:[#allocation4 + $0x40] sm:$0xff]
        %v375 = vld [vmem:[#allocation4 + $0x48] sm:$0xff]
        %v376 = vld [vmem:[#allocation4 + $0x50] sm:$0xff]
        %v377 = vld [vmem:[#allocation4 + $0x58] sm:$0xff]
        %v378 = vld [vmem:[#allocation4 + $0x60] sm:$0xff]
        %v379 = vld [vmem:[#allocation4 + $0x68] sm:$0xff]
        %v380 = vld [vmem:[#allocation4 + $0x70] sm:$0xff]
        %v381 = vld [vmem:[#allocation4 + $0x78] sm:$0xff]
        %v382 = vld [vmem:[%s4] sm:$0x1]
        %v384 = vperm.slane %v382, 0
        %386 = vmatpush.msra.mxu0 %v381
        %387 = vmatpush.msra.mxu0 %v380
        %388 = vmatpush.msra.mxu0 %v379
        %389 = vmatpush.msra.mxu0 %v378
        %390 = vmatpush.msra.mxu0 %v377
        %391 = vmatpush.msra.mxu0 %v376
        %392 = vmatpush.msra.mxu0 %v375
        %393 = vmatpush.msra.mxu0 %v374
        %394 = vmatpush.msra.mxu0 %v373
        %395 = vmatpush.msra.mxu0 %v372
        %396 = vmatpush.msra.mxu0 %v371
        %397 = vmatpush.msra.mxu0 %v370
        %398 = vmatpush.msra.mxu0 %v369
        %399 = vmatpush.msra.mxu0 %v368
        %400 = vmatpush.msra.mxu0 %v367
        %401 = vmatpush.msra.mxu0 %v366
        %402 = vmatmul.f32.gmra.mxu0 %v365
        %v403 = vpop.f32.mrf.mxu0
        %v404 = vadd.f32 %v384, %v403
        %405 = vdwg.mxu0
        %v406 = vmax.f32 %v404, 0.0
        %v407 = vld [vmem:[#allocation6] sm:$0xff]
        %v408 = vld [vmem:[#allocation6 + $0x8] sm:$0xff]
        %v409 = vld [vmem:[#allocation6 + $0x10] sm:$0xff]
        %v410 = vld [vmem:[#allocation6 + $0x18] sm:$0xff]
        %v411 = vld [vmem:[#allocation6 + $0x20] sm:$0xff]
        %v412 = vld [vmem:[#allocation6 + $0x28] sm:$0xff]
        %v413 = vld [vmem:[#allocation6 + $0x30] sm:$0xff]
        %v414 = vld [vmem:[#allocation6 + $0x38] sm:$0xff]
        %v415 = vld [vmem:[#allocation6 + $0x40] sm:$0xff]
        %v416 = vld [vmem:[#allocation6 + $0x48] sm:$0xff]
        %v417 = vld [vmem:[#allocation6 + $0x50] sm:$0xff]
        %v418 = vld [vmem:[#allocation6 + $0x58] sm:$0xff]
        %v419 = vld [vmem:[#allocation6 + $0x60] sm:$0xff]
        %v420 = vld [vmem:[#allocation6 + $0x68] sm:$0xff]
        %v421 = vld [vmem:[#allocation6 + $0x70] sm:$0xff]
        %v422 = vld [vmem:[#allocation6 + $0x78] sm:$0xff]
        %v423 = vld [vmem:[%s6] sm:$0x1]
        %v425 = vperm.slane %v423, 0
        %427 = vmatpush.msra.mxu0 %v422
        %428 = vmatpush.msra.mxu0 %v421
        %429 = vmatpush.msra.mxu0 %v420
        %430 = vmatpush.msra.mxu0 %v419
        %431 = vmatpush.msra.mxu0 %v418
        %432 = vmatpush.msra.mxu0 %v417
        %433 = vmatpush.msra.mxu0 %v416
        %434 = vmatpush.msra.mxu0 %v415
        %435 = vmatpush.msra.mxu0 %v414
        %436 = vmatpush.msra.mxu0 %v413
        %437 = vmatpush.msra.mxu0 %v412
        %438 = vmatpush.msra.mxu0 %v411
        %439 = vmatpush.msra.mxu0 %v410
        %440 = vmatpush.msra.mxu0 %v409
        %441 = vmatpush.msra.mxu0 %v408
        %442 = vmatpush.msra.mxu0 %v407
        %443 = vmatmul.f32.gmra.mxu0 %v406
        %v444 = vpop.f32.mrf.mxu0
        %v445 = vadd.f32 %v425, %v444
        %446 = vdwg.mxu0
        %447 = vst [vmem:[%s323] sm:$0xff] %v445
        %p448 = scmp.lt.s32.totalorder %s20, 1
        %s449 = scalar_select %p448, %s20, 1
        %s450 = smul.addr %s449, 8
        %s451 = scalar_lea.vmem %s7, %s450
        // Predicated region
        $region61: #{_lambda_.1} parent=47 // pred_check
          %p452 = pneg %p190
        $region62: #{_lambda_.1} parent=47 // pred_check_branch
          %454 = sbr.rel (%p452) target = $region64
        $region63: #{_lambda_.1} parent=47 // pred_region
          _
        $region64: #{_lambda_.1} parent=47 // pred_fallthru
          _
      $region48: #{_lambda_.1} parent=5 // pred_fallthru
        _
      %p455 = scmp.le.s32.totalorder 2, %s15
      // Predicated region
      $region65: #{_lambda_.1} parent=5 // pred_check
        %p456 = pneg %p455
      $region66: #{_lambda_.1} parent=5 // pred_check_branch
        %458 = sbr.rel (%p456) target = $region68
      $region67: #{_lambda_.1} parent=5 // pred_region
        %s459 = ssub.s32 %s15, 2
        // Predicated region
        $region69: #{_lambda_.1} parent=67 // pred_check
          %p460 = pneg %p196
        $region70: #{_lambda_.1} parent=67 // pred_check_branch
          %462 = sbr.rel (%p460) target = $region72
        $region71: #{_lambda_.1} parent=67 // pred_region
          %p463 = scmp.lt.s32.totalorder %s21, 1
          %s464 = scalar_select %p463, %s21, 1
          %s465 = smul.addr %s464, 8
          %s466 = scalar_lea.vmem %s7, %s465
        $region72: #{_lambda_.1} parent=67 // pred_fallthru
          _
      $region68: #{_lambda_.1} parent=5 // pred_fallthru
        _
    $region6: #{_lambda_.1} parent=1 // loop_footer
      %s19 = sadd.s32 1, %s15
    $region7: #{_lambda_.1} parent=1 // loop_footer_branch
      %14 = sbr.rel target = $region3
    $region8: #{_lambda_.1} parent=1 // loop_exit
      _
    %467 = vsyncpa [#allocation3], 1
    %s468 = scalar_lea.sflag [#allocation3], 1
    %469 = vsyncpa %s468, 1
    %470 = vsyncpa [#allocation5], 1

</llo_original>
